<compile_context>
chip_gen: v6e
topology: v6e:2x2x1
jax: 0.10.0
libtpu: 0.0.40
codegen_flags: <defaults>
</compile_context>

<pallas_src>
import functools
import math

import jax
import jax.numpy as jnp
from jax import lax
from jax.experimental import pallas as pl
from jax.experimental.pallas import tpu as pltpu

OUTPUT_DIM = 8  # self.output_dim in the PyTorch module


def _round_up(x, m):
    return (x + m - 1) // m * m


def _time_encoder_kernel(t1_ref, t2_ref, w_ref, b_ref, o_ref, *,
                         inv_per_time, n_time_interval):
    """One lane-tile of rows: bin the time deltas, one-hot, apply the linear.

    t1_ref, t2_ref: (1, TN)   f32  flattened timestamp[:, 1:] / [:, :-1]
    w_ref:          (8, Kpad) f32  linear_1.weight (zero-padded along K)
    b_ref:          (8, 1)    f32  linear_1.bias
    o_ref:          (8, TN)   f32  transposed time embedding (lane-dense)
    """
    k_pad = w_ref.shape[1]
    tn = o_ref.shape[1]

    # pass_time = relu(floor((t1 - t2) / per_time))  as an integer bin index.
    delta = (t1_ref[...] - t2_ref[...]) * inv_per_time            # (1, TN)
    idx = jnp.maximum(jnp.floor(delta), 0.0).astype(jnp.int32)    # relu(floor)
    # TODO(synk): PyTorch's scatter_ would raise on idx >= n_time_interval; we
    # clamp instead (bit-identical for all in-range inputs).
    idx = jnp.minimum(idx, n_time_interval - 1)                   # (1, TN)

    # one_hot^T[k, n] = (k == idx[n]) -- built via an iota compare, no scatter.
    k_iota = lax.broadcasted_iota(jnp.int32, (k_pad, tn), 0)
    one_hot_t = (k_iota == idx).astype(w_ref.dtype)               # (Kpad, TN)

    # time_embedding^T = W @ one_hot^T + b   (MXU matmul, f32 accumulation).
    o_ref[...] = (
        jnp.dot(w_ref[...], one_hot_t, preferred_element_type=jnp.float32)
        + b_ref[...]
    )


def time_encoder_forward(inp, timestamp, weight, bias, per_time):
    """JAX/Pallas equivalent of TimeEncoder.forward (the `train` flag is unused).

    Args:
      inp:       (batch, max_len) array — only its shape is used (as in PyTorch).
      timestamp: (batch, max_len + 1) float array.
      weight:    (8, n_time_interval)  — linear_1.weight.
      bias:      (8,)                  — linear_1.bias.
      per_time:  Python float          — self.pass_time / self.n_time_interval.

    Returns:
      (time_embedding (batch, max_len, 8) float32, timestamp[:, :-1])
    """
    batch, max_len = inp.shape
    d, k = weight.shape
    assert d == OUTPUT_DIM

    t2 = timestamp[:, :-1].astype(jnp.float32)   # (B, L) — also 2nd return value
    t1 = timestamp[:, 1:].astype(jnp.float32)    # (B, L)

    n = batch * max_len
    tn = min(512, _round_up(n, 128))             # lane-dense tile width
    n_pad = _round_up(n, tn)
    k_pad = _round_up(k, 8)

    t1_flat = jnp.pad(t1.reshape(1, n), ((0, 0), (0, n_pad - n)))
    t2_flat = jnp.pad(t2.reshape(1, n), ((0, 0), (0, n_pad - n)))
    w_pad = jnp.pad(weight.astype(jnp.float32), ((0, 0), (0, k_pad - k)))
    b_col = bias.astype(jnp.float32).reshape(d, 1)

    kernel = functools.partial(
        _time_encoder_kernel,
        inv_per_time=float(1.0 / per_time),
        n_time_interval=int(k),
    )

    out_t = pl.pallas_call(
        kernel,
        out_shape=jax.ShapeDtypeStruct((d, n_pad), jnp.float32),
        grid=(n_pad // tn,),
        in_specs=[
            pl.BlockSpec((1, tn), lambda i: (0, i)),        # t1 (flattened rows)
            pl.BlockSpec((1, tn), lambda i: (0, i)),        # t2 (flattened rows)
            pl.BlockSpec((d, k_pad), lambda i: (0, 0)),     # weight (resident)
            pl.BlockSpec((d, 1), lambda i: (0, 0)),         # bias (resident)
        ],
        out_specs=pl.BlockSpec((d, tn), lambda i: (0, i)),  # lane-dense slab
        compiler_params=pltpu.CompilerParams(
            dimension_semantics=("parallel",)),
    )(t1_flat, t2_flat, w_pad, b_col)

    time_embedding = out_t[:, :n].T.reshape(batch, max_len, d)
    return time_embedding, timestamp[:, :-1]


def _reference(inp, timestamp, weight, bias, per_time):
    """Pure-JAX mirror of the PyTorch forward (one-hot scatter + linear)."""
    batch, max_len = inp.shape
    d, k = weight.shape
    delta = (timestamp[:, 1:] - timestamp[:, :-1]) / per_time
    idx = jnp.maximum(jnp.floor(delta).astype(jnp.int32), 0)
    idx = jnp.minimum(idx, k - 1)
    one_hot = jax.nn.one_hot(idx.reshape(-1), k, dtype=jnp.float32)
    te = (one_hot @ weight.T + bias[None, :]).reshape(batch, max_len, d)
    return te, timestamp[:, :-1]


if __name__ == "__main__":
    key = jax.random.PRNGKey(0)
    k1, k2, k3, k4 = jax.random.split(key, 4)

    batch, max_len = 2, 8
    n_time_interval = 16
    per_time = 0.25   # = pass_time / n_time_interval (GetPasstime needs files)

    # `input` in the PyTorch module is an index tensor; only its shape matters.
    inp = jax.random.randint(k1, (batch, max_len), 0, 100, dtype=jnp.int32)
    # Monotone timestamps -> non-negative deltas; bin indices land in [0, 16).
    deltas = jax.random.uniform(k2, (batch, max_len), minval=0.0, maxval=3.9)
    timestamp = jnp.concatenate(
        [jnp.zeros((batch, 1), jnp.float32), jnp.cumsum(deltas, axis=1)],
        axis=1)                                         # (batch, max_len + 1)

    weight = jax.random.normal(
        k3, (OUTPUT_DIM, n_time_interval), dtype=jnp.float32) * math.sqrt(
            2.0 / (OUTPUT_DIM + n_time_interval))        # ~xavier_normal_
    bias = jax.random.normal(k4, (OUTPUT_DIM,), dtype=jnp.float32) * 0.1

    te, ts = time_encoder_forward(inp, timestamp, weight, bias, per_time)
    jax.block_until_ready((te, ts))

    te_ref, ts_ref = _reference(inp, timestamp, weight, bias, per_time)
    assert te.shape == (batch, max_len, OUTPUT_DIM)
    assert ts.shape == (batch, max_len)
    assert jnp.allclose(te, te_ref, atol=1e-5, rtol=1e-5), float(
        jnp.max(jnp.abs(te - te_ref)))
    assert jnp.allclose(ts, ts_ref)

    print("KERNEL_OK")
</pallas_src>

<mosaic_0001>
module attributes {stable_mosaic.version = 11 : i64} {
  func.func @_time_encoder_kernel(%arg0: i32, %arg1: memref<1x128xf32, #tpu.memory_space<vmem>>, %arg2: memref<1x128xf32, #tpu.memory_space<vmem>>, %arg3: memref<8x16xf32, #tpu.memory_space<vmem>>, %arg4: memref<8x1xf32, #tpu.memory_space<vmem>>, %arg5: memref<8x128xf32, #tpu.memory_space<vmem>>) attributes {dimension_semantics = [#tpu.dimension_semantics<parallel>], iteration_bounds = array<i64: 1>, scalar_prefetch = 0 : i64, scratch_operands = 0 : i64, tpu.core_type = #tpu.core_type<tc>, window_params = [{transform_indices = @transform_0, window_bounds = array<i64: 1, 128>}, {transform_indices = @transform_1, window_bounds = array<i64: 1, 128>}, {pipeline_mode = #tpu.pipeline_mode<synchronous>, transform_indices = @transform_2, window_bounds = array<i64: 8, 16>}, {pipeline_mode = #tpu.pipeline_mode<synchronous>, transform_indices = @transform_3, window_bounds = array<i64: 8, 1>}, {transform_indices = @transform_4, window_bounds = array<i64: 8, 128>}]} {
    %c0 = arith.constant 0 : index
    %c0_0 = arith.constant 0 : index
    %0 = vector.load %arg1[%c0, %c0_0] : memref<1x128xf32, #tpu.memory_space<vmem>>, vector<1x128xf32>
    %c0_1 = arith.constant 0 : index
    %c0_2 = arith.constant 0 : index
    %1 = vector.load %arg2[%c0_1, %c0_2] : memref<1x128xf32, #tpu.memory_space<vmem>>, vector<1x128xf32>
    %2 = arith.subf %0, %1 : vector<1x128xf32>
    %cst = arith.constant 4.000000e+00 : f32
    %3 = vector.broadcast %cst : f32 to vector<1x128xf32>
    %4 = arith.mulf %2, %3 : vector<1x128xf32>
    %5 = math.floor %4 : vector<1x128xf32>
    %cst_3 = arith.constant 0.000000e+00 : f32
    %6 = vector.broadcast %cst_3 : f32 to vector<1x128xf32>
    %7 = arith.maximumf %5, %6 : vector<1x128xf32>
    %8 = arith.fptosi %7 : vector<1x128xf32> to vector<1x128xi32>
    %c15_i32 = arith.constant 15 : i32
    %9 = vector.broadcast %c15_i32 : i32 to vector<1x128xi32>
    %10 = arith.minsi %8, %9 : vector<1x128xi32>
    %11 = tpu.iota {dimensions = array<i32: 0>} : vector<16x128xi32>
    %12 = vector.broadcast %10 : vector<1x128xi32> to vector<16x128xi32>
    %13 = arith.cmpi eq, %11, %12 : vector<16x128xi32>
    %14 = arith.extui %13 : vector<16x128xi1> to vector<16x128xi32>
    %15 = arith.sitofp %14 : vector<16x128xi32> to vector<16x128xf32>
    %c0_4 = arith.constant 0 : index
    %c0_5 = arith.constant 0 : index
    %16 = vector.load %arg3[%c0_4, %c0_5] : memref<8x16xf32, #tpu.memory_space<vmem>>, vector<8x16xf32>
    %cst_6 = arith.constant dense<0.000000e+00> : vector<8x128xf32>
    %17 = tpu.matmul %16, %15, %cst_6 {dimension_numbers = #tpu.dot_dimension_numbers<[1], [0], [0], [1], [0, 0, 1, 1], [], []>} : vector<8x16xf32>, vector<16x128xf32>, vector<8x128xf32> -> vector<8x128xf32>
    %c0_7 = arith.constant 0 : index
    %c0_8 = arith.constant 0 : index
    %18 = vector.load %arg4[%c0_7, %c0_8] : memref<8x1xf32, #tpu.memory_space<vmem>>, vector<8x1xf32>
    %19 = vector.broadcast %18 : vector<8x1xf32> to vector<8x128xf32>
    %20 = arith.addf %17, %19 : vector<8x128xf32>
    %c0_9 = arith.constant 0 : index
    %c0_10 = arith.constant 0 : index
    %21 = vector.load %arg5[%c0_9, %c0_10] : memref<8x128xf32, #tpu.memory_space<vmem>>, vector<8x128xf32>
    tpu.vector_store %arg5[%c0_9, %c0_10], %20 {strides = array<i32>} : memref<8x128xf32, #tpu.memory_space<vmem>>, vector<8x128xf32>,
    return
  }
  func.func @transform_0(%arg0: i32) -> (i32, i32) {
    %c0_i32 = arith.constant 0 : i32
    %c0_i32_0 = arith.constant 0 : i32
    return %c0_i32, %arg0 : i32, i32
  }
  func.func @transform_1(%arg0: i32) -> (i32, i32) {
    %c0_i32 = arith.constant 0 : i32
    %c0_i32_0 = arith.constant 0 : i32
    return %c0_i32, %arg0 : i32, i32
  }
  func.func @transform_2(%arg0: i32) -> (i32, i32) {
    %c0_i32 = arith.constant 0 : i32
    %c0_i32_0 = arith.constant 0 : i32
    %c0_i32_1 = arith.constant 0 : i32
    return %c0_i32, %c0_i32_0 : i32, i32
  }
  func.func @transform_3(%arg0: i32) -> (i32, i32) {
    %c0_i32 = arith.constant 0 : i32
    %c0_i32_0 = arith.constant 0 : i32
    %c0_i32_1 = arith.constant 0 : i32
    return %c0_i32, %c0_i32_0 : i32, i32
  }
  func.func @transform_4(%arg0: i32) -> (i32, i32) {
    %c0_i32 = arith.constant 0 : i32
    %c0_i32_0 = arith.constant 0 : i32
    return %c0_i32, %arg0 : i32, i32
  }
}

</mosaic_0001>

<llo_original>
// kernel: tpu_custom_call.1
$region0: #{tpu_custom_call.1}
  #allocation0 [shape = 'u32[]', space=smem, size = 0x4, offset = 0x4, fixed_abs, tag = 'smem constant byte address 0x4 - core index']
  #allocation1 [shape = 'u32[144,128]{1,0:T(1,128)}', space=vmem, size = 0x12000, scoped, tag = 'internal scratch']
  %s0 = inlined_call_operand.vmem [shape: f32[1,128], index: 0, kind: input, shape index: {}]
  %s1 = inlined_call_operand.vmem [shape: f32[1,128], index: 1, kind: input, shape index: {}]
  %s2 = inlined_call_operand.vmem [shape: f32[8,16], index: 2, kind: input, shape index: {}]
  %s3 = inlined_call_operand.vmem [shape: f32[8,1], index: 3, kind: input, shape index: {}]
  %s4 = inlined_call_operand.hbm [shape: f32[8,128], index: 4, kind: output, shape index: {}]
  %s5 = sld [smem:[#allocation0]]
  $region26: #{tpu_custom_call.1} parent=0
    _
  %s7 = ssub.s32 1, %s5
  %s8 = scalar_select 0, %s7, %s5
  $region1: #{tpu_custom_call.1} parent=0
    #allocation2 [shape = 'u8[4096]{0}', space=vmem, size = 0x1000, scoped, tag = 'output window, operand 0, single buffered']
    #allocation3 [shape = 's32[1]{0}', space=sflag, size = 0x4, scoped, tag = 'scoped memory for tpu_custom_call.1']
    %9 = vsyncpa [#allocation3], 0
    // Predicated region
    $region2: #{tpu_custom_call.1} parent=1 // pred_check
      _
    $region3: #{tpu_custom_call.1} parent=1 // pred_check_branch
      %11 = sbr.rel (0) target = $region5
    $region4: #{tpu_custom_call.1} parent=1 // pred_region
      _
    $region5: #{tpu_custom_call.1} parent=1 // pred_fallthru
      _
    // Predicated region
    $region6: #{tpu_custom_call.1} parent=1 // pred_check
      _
    $region7: #{tpu_custom_call.1} parent=1 // pred_check_branch
      %13 = sbr.rel (0) target = $region9
    $region8: #{tpu_custom_call.1} parent=1 // pred_region
      _
    $region9: #{tpu_custom_call.1} parent=1 // pred_fallthru
      _
    // Predicated region
    $region10: #{tpu_custom_call.1} parent=1 // pred_check
      _
    $region11: #{tpu_custom_call.1} parent=1 // pred_check_branch
      %15 = sbr.rel (0) target = $region13
    $region12: #{tpu_custom_call.1} parent=1 // pred_region
      _
    $region13: #{tpu_custom_call.1} parent=1 // pred_fallthru
      _
    // Predicated region
    $region14: #{tpu_custom_call.1} parent=1 // pred_check
      _
    $region15: #{tpu_custom_call.1} parent=1 // pred_check_branch
      %17 = sbr.rel (0) target = $region17
    $region16: #{tpu_custom_call.1} parent=1 // pred_region
      _
    $region17: #{tpu_custom_call.1} parent=1 // pred_fallthru
      _
    %v18 = vld [vmem:[%s0] sm:$0x1]
    %v19 = vld [vmem:[%s1] sm:$0x1]
    %v20 = vsub.f32 %v18, %v19
    %v21 = vmul.f32 %v20, 4.0
    %v22 = vfloor.f32 %v21
    %v23 = vmax.f32 %v22, 0.0
    %v24 = vcvt.f32.s32.to.zero.pseudo %v23
    %vm25 = vcmp.lt.s32.totalorder %v24, 15
    %v26 = vsel %vm25, %v24, 15
    %v27 = vlaneseq
    %v28 = vshrl.u32 %v27, 7
    %v29 = vadd.s32 %v28, 8
    %v30 = vlaneseq
    %v31 = vshrl.u32 %v30, 7
    %v32 = vsub.s32 0, %v31
    %v33 = vrot.slane %v26, %v32
    %vm34 = vcmp.eq.s32.totalorder %v28, %v33
    %vm35 = vcmp.eq.s32.totalorder %v29, %v33
    %v36 = vsel %vm34, 1, 0
    %v37 = vsel %vm35, 1, 0
    %v38 = vcvt.s32.f32 %v36
    %v39 = vcvt.s32.f32 %v37
    %v40 = vld [vmem:[%s2] sm:$0xff]
    %v41 = vld [vmem:[%s3] sm:$0xff]
    %43 = vset.pattern.permute.xlu0 0
    %44 = vperm.xlu0 %43, %v41
    %v45 = vpop.permute.xlu0 %44
    %vm47 = vcmask 130048
    %v49 = vsel %vm47, %v40, 0
    %51 = vmatprep.subr.mxu0 0.0
    %52 = vmatpush1.msra.mxu0 0.0
    %53 = vmatprep.subr.mxu0 0.0
    %54 = vmatpush1.msra.mxu0 0.0
    %55 = vmatprep.subr.mxu0 0.0
    %56 = vmatpush1.msra.mxu0 0.0
    %57 = vmatprep.subr.mxu0 0.0
    %58 = vmatpush1.msra.mxu0 0.0
    %59 = vmatprep.subr.mxu0 0.0
    %60 = vmatpush1.msra.mxu0 0.0
    %61 = vmatprep.subr.mxu0 0.0
    %62 = vmatpush1.msra.mxu0 0.0
    %63 = vmatprep.subr.mxu0 0.0
    %64 = vmatpush1.msra.mxu0 0.0
    %65 = vmatprep.subr.mxu0 0.0
    %66 = vmatpush1.msra.mxu0 0.0
    %67 = vmatprep.subr.mxu0 0.0
    %68 = vmatpush1.msra.mxu0 0.0
    %69 = vmatprep.subr.mxu0 0.0
    %70 = vmatpush1.msra.mxu0 0.0
    %71 = vmatprep.subr.mxu0 0.0
    %72 = vmatpush1.msra.mxu0 0.0
    %73 = vmatprep.subr.mxu0 0.0
    %74 = vmatpush1.msra.mxu0 0.0
    %75 = vmatprep.subr.mxu0 0.0
    %76 = vmatpush1.msra.mxu0 0.0
    %77 = vmatprep.subr.mxu0 0.0
    %78 = vmatpush1.msra.mxu0 0.0
    %79 = vmatprep.subr.mxu0 0.0
    %80 = vmatpush1.msra.mxu0 %v39
    %81 = vmatprep.subr.mxu0 0.0
    %82 = vmatpush1.msra.mxu0 %v38
    %83 = vmatprep.subr.mxu0 0.0
    %84 = vmatpush2.msra.mxu0 0.0
    %85 = vmatprep.subr.mxu0 0.0
    %86 = vmatpush2.msra.mxu0 0.0
    %87 = vmatprep.subr.mxu0 0.0
    %88 = vmatpush2.msra.mxu0 0.0
    %89 = vmatprep.subr.mxu0 0.0
    %90 = vmatpush2.msra.mxu0 0.0
    %91 = vmatprep.subr.mxu0 0.0
    %92 = vmatpush2.msra.mxu0 0.0
    %93 = vmatprep.subr.mxu0 0.0
    %94 = vmatpush2.msra.mxu0 0.0
    %95 = vmatprep.subr.mxu0 0.0
    %96 = vmatpush2.msra.mxu0 0.0
    %97 = vmatprep.subr.mxu0 0.0
    %98 = vmatpush2.msra.mxu0 0.0
    %99 = vmatprep.subr.mxu0 0.0
    %100 = vmatpush2.msra.mxu0 0.0
    %101 = vmatprep.subr.mxu0 0.0
    %102 = vmatpush2.msra.mxu0 0.0
    %103 = vmatprep.subr.mxu0 0.0
    %104 = vmatpush2.msra.mxu0 0.0
    %105 = vmatprep.subr.mxu0 0.0
    %106 = vmatpush2.msra.mxu0 0.0
    %107 = vmatprep.subr.mxu0 0.0
    %108 = vmatpush2.msra.mxu0 0.0
    %109 = vmatprep.subr.mxu0 0.0
    %110 = vmatpush2.msra.mxu0 0.0
    %111 = vmatprep.subr.mxu0 0.0
    %112 = vmatpush2.msra.mxu0 0.0
    %113 = vmatprep.subr.mxu0 0.0
    %114 = vmatpush2.msra.mxu0 0.0
    %115 = vmatprep.mubr.f32.mxu0 0.0
    %116 = vmatmul.mubr.f32.gmra.mxu0 %v49
    %v117 = vpop.f32.mrf.mxu0
    %v118 = vadd.f32 %v45, %v117
    %v119 = vpop.f32.mrf.mxu0
    %120 = vdwg.mxu0
    %121 = vst [vmem:[#allocation2] sm:$0xff] %v118
    // Predicated region
    $region18: #{tpu_custom_call.1} parent=1 // pred_check
      _
    $region19: #{tpu_custom_call.1} parent=1 // pred_check_branch
      %123 = sbr.rel (0) target = $region21
    $region20: #{tpu_custom_call.1} parent=1 // pred_region
      %s125 = ssub.s32 128, 128
      %126 = vsyncadd [#allocation3], %s125
      %s128 = sshll.u32 [#allocation2], 4
      %s129 = int_to_ptr.vmem [resolvable:$true] %s128
      %131 = dma.vmem_to_hbm [thread:$0]  %s129, 128, %s4, [#allocation3]
    $region21: #{tpu_custom_call.1} parent=1 // pred_fallthru
      _
    // Predicated region
    $region22: #{tpu_custom_call.1} parent=1 // pred_check
      _
    $region23: #{tpu_custom_call.1} parent=1 // pred_check_branch
      %133 = sbr.rel (0) target = $region25
    $region24: #{tpu_custom_call.1} parent=1 // pred_region
      %134 = dma.done [#allocation3], 128
    $region25: #{tpu_custom_call.1} parent=1 // pred_fallthru
      _
    %135 = vsyncpa [#allocation3], 1

</llo_original>
